<compile_context>
chip_gen: v7x
topology: tpu7x:2x2x1
jax: 0.10.0
libtpu: 0.0.40
codegen_flags: <defaults>
</compile_context>

<pallas_src>
import math

import jax
import jax.numpy as jnp
from jax.experimental import pallas as pl
from jax.experimental.pallas import tpu as pltpu

_LANE = 128


def _round_up(v, m):
    return ((v + m - 1) // m) * m


def _vmem_capacity_bytes():
    try:
        return int(pltpu.get_tpu_info().vmem_capacity_bytes)
    except Exception:
        return 64 * 1024 * 1024  # conservative default (v7x per-TC VMEM)


def _largest_aligned_divisor(total, upper, align):
    """Largest d <= upper with d % align == 0 and total % d == 0, else None."""
    upper = min(upper, total)
    best = None
    for d in range(align, upper + 1, align):
        if total % d == 0:
            best = d
    return best


# ---------------------------------------------------------------------------
# Kernels
# ---------------------------------------------------------------------------

def _mm_kernel(x_ref, w_ref, o_ref):
    # Single K strip: no accumulator scratch, direct lane-dense store.
    o_ref[...] = jnp.dot(
        x_ref[...], w_ref[...], preferred_element_type=jnp.float32
    ).astype(o_ref.dtype)


def _mm_kernel_acc(x_ref, w_ref, o_ref, acc_ref):
    # Reduction axis (K) is the LAST grid axis ("arbitrary").
    @pl.when(pl.program_id(2) == 0)
    def _():
        acc_ref[...] = jnp.zeros_like(acc_ref)

    acc_ref[...] += jnp.dot(
        x_ref[...], w_ref[...], preferred_element_type=jnp.float32
    )

    @pl.when(pl.program_id(2) == pl.num_programs(2) - 1)
    def _():
        o_ref[...] = acc_ref[...].astype(o_ref.dtype)


# ---------------------------------------------------------------------------
# Parameter prep (hoist / cache this — do NOT call per forward step)
# ---------------------------------------------------------------------------

def fold_basis_weight(weight, coeff, *, out_features, n_bases, n_projections,
                      compute_dtype=None):
    """Fold coefficients into the basis weight and lane-pad the column dim.

    weight: (out_features * n_bases, H)   torch nn.Linear weight layout
    coeff:  (*n_projections, n_bases)
    Returns w_eff of shape (H, PO_pad), PO_pad = round_up(P_total*O, 128),
    column index p*out_features + o (padded columns are zero).
    Pass compute_dtype=jnp.bfloat16 to feed the MXU in bf16 when precision
    allows (accumulation stays f32 in the kernel).
    """
    O, B = out_features, n_bases
    P_total = int(math.prod(n_projections))
    OB, H = weight.shape
    assert OB == O * B
    assert coeff.shape[-1] == B and int(math.prod(coeff.shape[:-1])) == P_total

    w_boh = weight.reshape(B, O, H)
    coeff2 = coeff.reshape(P_total, B)
    # (H, P, O) -> lane-dense (H, P*O); column p*O + o matches output layout.
    w_eff = jnp.einsum("pb,boh->hpo", coeff2, w_boh).reshape(H, P_total * O)

    PO = P_total * O
    PO_pad = _round_up(PO, _LANE)
    if PO_pad != PO:
        w_eff = jnp.pad(w_eff, ((0, 0), (0, PO_pad - PO)))
    if compute_dtype is not None:
        w_eff = w_eff.astype(compute_dtype)
    return w_eff


# ---------------------------------------------------------------------------
# Forward with a pre-folded weight
# ---------------------------------------------------------------------------

def basis_linear_folded(x, w_eff, *, out_features, n_projections, interpret=False):
    """x: (..., H); w_eff from fold_basis_weight. Returns (..., *n_projections, O)."""
    O = out_features
    P_total = int(math.prod(n_projections))
    PO = P_total * O
    H = x.shape[-1]
    assert w_eff.shape[0] == H
    PO_pad = w_eff.shape[1]
    assert PO_pad >= PO and PO_pad % _LANE == 0, "w_eff must come from fold_basis_weight"

    lead = x.shape[:-1]
    N = int(math.prod(lead)) if lead else 1
    x2 = x.reshape(N, H)

    # Common compute dtype (fold with compute_dtype=x.dtype to avoid casts here).
    cdt = jnp.promote_types(x2.dtype, w_eff.dtype)
    if x2.dtype != cdt:
        x2 = x2.astype(cdt)
    if w_eff.dtype != cdt:
        w_eff = w_eff.astype(cdt)

    out_dtype = x.dtype
    in_itemsize = jnp.dtype(cdt).itemsize
    out_itemsize = jnp.dtype(out_dtype).itemsize
    sublane = max(8, 32 // in_itemsize)   # 8 for f32, 16 for bf16, 32 for int8/fp8

    # ---- generation-aware VMEM budget ----
    vmem_cap = _vmem_capacity_bytes()
    vmem_limit = min(int(vmem_cap * 0.85), vmem_cap - 4 * 1024 * 1024)
    budget = max(24 * 1024 * 1024, vmem_limit - 12 * 1024 * 1024)

    # ---- reduction (K) tile: only tile when H is 128-aligned, else full strip ----
    if H % _LANE == 0:
        tk = _largest_aligned_divisor(H, 2048, _LANE) or H
    else:
        tk = H

    # ---- output-column tile: lane-dense divisor of PO_pad ----
    tn = _largest_aligned_divisor(PO_pad, 2048, _LANE) or PO_pad

    # ---- row (M) tile ----
    max_tm = 1024 if vmem_cap >= 96 * 1024 * 1024 else 512
    if N < sublane:
        tm = N                                   # block dim == full array dim
    else:
        tm = min(max_tm, (min(N, max_tm) // sublane) * sublane)
    # v7x has 2 TensorCores: keep >=2 steps on the parallel row axis when cheap.
    if N >= 256 and tm >= 256 and pl.cdiv(N, tm) == 1:
        tm = max(128, _round_up(tm // 2, sublane))

    # ---- VMEM fit: shrink the dim feeding the dominant term ----
    def footprint(tm_, tk_, tn_):
        kt_ = pl.cdiv(H, tk_)
        x_b = 2 * tm_ * tk_ * in_itemsize
        w_b = 2 * tk_ * tn_ * in_itemsize
        o_b = 2 * tm_ * tn_ * out_itemsize
        a_b = tm_ * tn_ * 4 if kt_ > 1 else 0
        return x_b + w_b + o_b + a_b

    def _shrink_tk(v):
        if H % _LANE != 0 or v <= _LANE:
            return None
        return _largest_aligned_divisor(H, v // 2, _LANE)

    def _shrink_tn(v):
        if v <= _LANE:
            return None
        return _largest_aligned_divisor(PO_pad, v // 2, _LANE)

    def _shrink_tm(v):
        if v <= sublane:
            return None
        return max(sublane, (v // 2 // sublane) * sublane)

    for _ in range(64):
        if footprint(tm, tk, tn) <= budget:
            break
        kt_now = pl.cdiv(H, tk)
        w_b = 2 * tk * tn * in_itemsize
        o_b = 2 * tm * tn * out_itemsize + (tm * tn * 4 if kt_now > 1 else 0)
        x_b = 2 * tm * tk * in_itemsize
        order = []
        for _, dims in sorted(
                [(w_b, ("tn", "tk")), (o_b, ("tn", "tm")), (x_b, ("tk", "tm"))],
                key=lambda t: t[0], reverse=True):
            for d in dims:
                if d not in order:
                    order.append(d)
        new = None
        for d in order:
            if d == "tk":
                new = _shrink_tk(tk)
                if new is not None:
                    tk = new
                    break
            elif d == "tn":
                new = _shrink_tn(tn)
                if new is not None:
                    tn = new
                    break
            else:
                new = _shrink_tm(tm)
                if new is not None:
                    tm = new
                    break
        if new is None:
            break  # cannot shrink further; rely on vmem_limit / compiler

    kt = pl.cdiv(H, tk)           # exact when H % 128 == 0, else kt == 1
    row_tiles = pl.cdiv(N, tm)    # last row tile may be partial (no x padding)
    col_tiles = PO_pad // tn

    out_shape = jax.ShapeDtypeStruct((N, PO_pad), out_dtype)

    if kt == 1:
        grid = (row_tiles, col_tiles)
        in_specs = [
            pl.BlockSpec((tm, tk), lambda i, j: (i, 0)),
            pl.BlockSpec((tk, tn), lambda i, j: (0, j)),
        ]
        out_specs = pl.BlockSpec((tm, tn), lambda i, j: (i, j))
        scratch = []
        kernel = _mm_kernel
        dims = ("parallel", "parallel")
    else:
        grid = (row_tiles, col_tiles, kt)
        in_specs = [
            pl.BlockSpec((tm, tk), lambda i, j, k: (i, k)),
            pl.BlockSpec((tk, tn), lambda i, j, k: (k, j)),
        ]
        out_specs = pl.BlockSpec((tm, tn), lambda i, j, k: (i, j))
        scratch = [pltpu.VMEM((tm, tn), jnp.float32)]
        kernel = _mm_kernel_acc
        dims = ("parallel", "parallel", "arbitrary")

    out = pl.pallas_call(
        kernel,
        out_shape=out_shape,
        grid_spec=pltpu.PrefetchScalarGridSpec(
            num_scalar_prefetch=0,
            grid=grid,
            in_specs=in_specs,
            out_specs=out_specs,
            scratch_shapes=scratch,
        ),
        compiler_params=pltpu.CompilerParams(
            dimension_semantics=dims,
            vmem_limit_bytes=vmem_limit,
        ),
        interpret=interpret,
    )(x2, w_eff)

    if PO_pad != PO:
        out = out[:, :PO]
    return out.reshape(*lead, *n_projections, O)


# ---------------------------------------------------------------------------
# Convenience wrapper matching the torch module signature
# ---------------------------------------------------------------------------

def basis_linear(x, weight, coeff, *, in_features, out_features, n_bases,
                 n_projections):
    """Full BasisLinear forward. NOTE: for repeated calls with static params,
    hoist `fold_basis_weight` out of the step function (it is param prep)."""
    in_features = tuple(in_features)
    n_projections = tuple(n_projections)
    assert tuple(x.shape[-len(in_features):]) == in_features

    matched = []
    for in_dim, proj_dim in zip(reversed(in_features[:-1]), reversed(n_projections)):
        if in_dim == proj_dim:
            matched.insert(0, proj_dim)
    if matched:
        # TODO(synk): matched-dims broadcasting path (basis vecs aligned with proj dims) not implemented.
        raise NotImplementedError("matched projection dims not supported in this kernel")

    w_eff = fold_basis_weight(
        weight, coeff,
        out_features=out_features, n_bases=n_bases, n_projections=n_projections,
        compute_dtype=x.dtype,
    )
    return basis_linear_folded(
        x, w_eff, out_features=out_features, n_projections=n_projections)


def _reference(x, weight, coeff, *, out_features, n_bases, n_projections):
    """Plain-JAX mirror of the torch forward (no matched dims)."""
    basis_output = x @ weight.T                                        # (..., O*B)
    basis_vecs = basis_output.reshape(*x.shape[:-1], n_bases, out_features)
    basis_vecs = basis_vecs.reshape(
        *x.shape[:-1], *(1 for _ in n_projections), n_bases, out_features)
    coeff_view = coeff.reshape(
        *(1 for _ in x.shape[:-1]), *n_projections, n_bases, 1)
    return jnp.sum(coeff_view * basis_vecs, axis=-2)


if __name__ == "__main__":
    # Module configuration (no matched dims: in_features is 1-D).
    in_features = (32,)      # H
    out_features = 32        # O
    n_bases = 4              # B
    n_projections = (6,)     # P

    H = in_features[-1]
    B, O, P = n_bases, out_features, n_projections[0]

    key = jax.random.PRNGKey(0)
    kx, kw, kc = jax.random.split(key, 3)

    # x: (batch=2, seq=8, H=32)
    x = jax.random.normal(kx, (2, 8, H), dtype=jnp.float32)

    # Deterministic parameter init (shapes match the torch module).
    # bases weight: nn.Linear(H, O*B, bias=False) -> weight (O*B, H)
    weight = jax.random.normal(kw, (O * B, H), dtype=jnp.float32) * 0.05
    # coefficients: xavier_normal on shape (*n_projections, n_bases)
    xavier_std = math.sqrt(2.0 / (P + B))
    coeff = jax.random.normal(kc, (P, B), dtype=jnp.float32) * xavier_std

    # Parameter prep (hoisted): fold coeff into the weight once.
    w_eff = fold_basis_weight(
        weight, coeff,
        out_features=out_features, n_bases=n_bases, n_projections=n_projections,
        compute_dtype=x.dtype,
    )

    out = basis_linear_folded(
        x, w_eff, out_features=out_features, n_projections=n_projections)
    out = jax.block_until_ready(out)

    ref = _reference(
        x, weight, coeff,
        out_features=out_features, n_bases=n_bases, n_projections=n_projections,
    )

    assert out.shape == (2, 8, P, O), out.shape
    max_err = float(jnp.max(jnp.abs(out - ref)))
    assert jnp.allclose(out, ref, rtol=1e-4, atol=1e-5), max_err
    print("KERNEL_OK")
</pallas_src>

<mosaic_0001>
module attributes {stable_mosaic.version = 11 : i64} {
  func.func @_mm_kernel(%arg0: i32, %arg1: i32, %arg2: memref<16x32xf32, #tpu.memory_space<vmem>>, %arg3: memref<32x256xf32, #tpu.memory_space<vmem>>, %arg4: memref<16x256xf32, #tpu.memory_space<vmem>>) attributes {dimension_semantics = [#tpu.dimension_semantics<parallel>, #tpu.dimension_semantics<parallel>], iteration_bounds = array<i64: 1, 1>, scalar_prefetch = 0 : i64, scratch_operands = 0 : i64, tpu.core_type = #tpu.core_type<tc>, window_params = [{transform_indices = @transform_0, window_bounds = array<i64: 16, 32>}, {transform_indices = @transform_1, window_bounds = array<i64: 32, 256>}, {transform_indices = @transform_2, window_bounds = array<i64: 16, 256>}]} {
    %c0 = arith.constant 0 : index
    %c0_0 = arith.constant 0 : index
    %0 = vector.load %arg2[%c0, %c0_0] : memref<16x32xf32, #tpu.memory_space<vmem>>, vector<16x32xf32>
    %c0_1 = arith.constant 0 : index
    %c0_2 = arith.constant 0 : index
    %1 = vector.load %arg3[%c0_1, %c0_2] : memref<32x256xf32, #tpu.memory_space<vmem>>, vector<32x256xf32>
    %cst = arith.constant dense<0.000000e+00> : vector<16x256xf32>
    %2 = tpu.matmul %0, %1, %cst {dimension_numbers = #tpu.dot_dimension_numbers<[1], [0], [0], [1], [0, 0, 1, 1], [], []>} : vector<16x32xf32>, vector<32x256xf32>, vector<16x256xf32> -> vector<16x256xf32>
    %c0_3 = arith.constant 0 : index
    %c0_4 = arith.constant 0 : index
    %3 = vector.load %arg4[%c0_3, %c0_4] : memref<16x256xf32, #tpu.memory_space<vmem>>, vector<16x256xf32>
    tpu.vector_store %arg4[%c0_3, %c0_4], %2 {strides = array<i32>} : memref<16x256xf32, #tpu.memory_space<vmem>>, vector<16x256xf32>,
    return
  }
  func.func @transform_0(%arg0: i32, %arg1: i32) -> (i32, i32) {
    %c0_i32 = arith.constant 0 : i32
    %c0_i32_0 = arith.constant 0 : i32
    return %arg0, %c0_i32 : i32, i32
  }
  func.func @transform_1(%arg0: i32, %arg1: i32) -> (i32, i32) {
    %c0_i32 = arith.constant 0 : i32
    %c0_i32_0 = arith.constant 0 : i32
    return %c0_i32, %arg1 : i32, i32
  }
  func.func @transform_2(%arg0: i32, %arg1: i32) -> (i32, i32) {
    %c0_i32 = arith.constant 0 : i32
    return %arg0, %arg1 : i32, i32
  }
}

</mosaic_0001>

<llo_original>
// kernel: tpu_custom_call.1
$region0: #{tpu_custom_call.1}
  #allocation0 [shape = 'u32[]', space=smem, size = 0x4, offset = 0x4, fixed_abs, tag = 'smem constant byte address 0x4 - core index']
  #allocation1 [shape = 'u32[144,128]{1,0:T(1,128)}', space=vmem, size = 0x12000, scoped, tag = 'internal scratch']
  %s0 = inlined_call_operand.hbm [shape: f32[16,32], index: 0, kind: input, shape index: {}]
  %s1 = inlined_call_operand.hbm [shape: f32[32,256], index: 1, kind: input, shape index: {}]
  %s2 = inlined_call_operand.hbm [shape: f32[16,256], index: 2, kind: output, shape index: {}]
  %s3 = sld [smem:[#allocation0]]
  $region26: #{tpu_custom_call.1} parent=0
    _
  %s5 = ssub.s32 1, %s3
  %s6 = scalar_select 0, %s5, %s3
  $region1: #{tpu_custom_call.1} parent=0
    #allocation2 [shape = 'u8[8192]{0}', space=vmem, size = 0x2000, scoped, tag = 'input window, operand 0, single buffered']
    #allocation3 [shape = 's32[1]{0}', space=sflag, size = 0x4, scoped, tag = 'scoped memory for tpu_custom_call.1']
    #allocation4 [shape = 's32[1]{0}', space=sflag, size = 0x4, scoped, tag = 'scoped memory for tpu_custom_call.1']
    #allocation5 [shape = 'u8[32768]{0}', space=vmem, size = 0x8000, scoped, tag = 'input window, operand 1, single buffered']
    #allocation6 [shape = 's32[1]{0}', space=sflag, size = 0x4, scoped, tag = 'scoped memory for tpu_custom_call.1']
    #allocation7 [shape = 'u8[16384]{0}', space=vmem, size = 0x4000, scoped, tag = 'output window, operand 0, single buffered']
    %7 = vsyncpa [#allocation3], 0
    %8 = vsyncpa [#allocation6], 0
    %9 = vsyncpa [#allocation4], 0
    // Predicated region
    $region2: #{tpu_custom_call.1} parent=1 // pred_check
      _
    $region3: #{tpu_custom_call.1} parent=1 // pred_check_branch
      %11 = sbr.rel (0) target = $region5
    $region4: #{tpu_custom_call.1} parent=1 // pred_region
      %s13 = ssub.s32 256, 256
      %14 = vsyncadd [#allocation3], %s13
      %s15 = sshll.u32 [#allocation2], 4
      %s16 = int_to_ptr.vmem [resolvable:$true] %s15
      %21 = dma.hbm_to_vmem [thread:$0]  %s0, 256, %s16, [#allocation3], 128, 128, 8
    $region5: #{tpu_custom_call.1} parent=1 // pred_fallthru
      _
    // Predicated region
    $region6: #{tpu_custom_call.1} parent=1 // pred_check
      _
    $region7: #{tpu_custom_call.1} parent=1 // pred_check_branch
      %23 = sbr.rel (0) target = $region9
    $region8: #{tpu_custom_call.1} parent=1 // pred_region
      %s25 = ssub.s32 1024, 1024
      %26 = vsyncadd [#allocation6], %s25
      %s27 = sshll.u32 [#allocation5], 4
      %s28 = int_to_ptr.vmem [resolvable:$true] %s27
      %33 = dma.hbm_to_vmem [thread:$0]  %s1, 1024, %s28, [#allocation6], 256, 256, 16
    $region9: #{tpu_custom_call.1} parent=1 // pred_fallthru
      _
    // Predicated region
    $region10: #{tpu_custom_call.1} parent=1 // pred_check
      _
    $region11: #{tpu_custom_call.1} parent=1 // pred_check_branch
      %35 = sbr.rel (0) target = $region13
    $region12: #{tpu_custom_call.1} parent=1 // pred_region
      %36 = dma.done [#allocation3], 256
    $region13: #{tpu_custom_call.1} parent=1 // pred_fallthru
      _
    // Predicated region
    $region14: #{tpu_custom_call.1} parent=1 // pred_check
      _
    $region15: #{tpu_custom_call.1} parent=1 // pred_check_branch
      %38 = sbr.rel (0) target = $region17
    $region16: #{tpu_custom_call.1} parent=1 // pred_region
      %39 = dma.done [#allocation6], 1024
    $region17: #{tpu_custom_call.1} parent=1 // pred_fallthru
      _
    %v40 = vld [vmem:[#allocation2] sm:$0xff]
    %v41 = vld [vmem:[#allocation2 + $0x8] sm:$0xff]
    %v42 = vld [vmem:[#allocation5] sm:$0xff]
    %v43 = vld [vmem:[#allocation5 + $0x8] sm:$0xff]
    %v44 = vld [vmem:[#allocation5 + $0x10] sm:$0xff]
    %v45 = vld [vmem:[#allocation5 + $0x18] sm:$0xff]
    %v46 = vld [vmem:[#allocation5 + $0x20] sm:$0xff]
    %v47 = vld [vmem:[#allocation5 + $0x28] sm:$0xff]
    %v48 = vld [vmem:[#allocation5 + $0x30] sm:$0xff]
    %v49 = vld [vmem:[#allocation5 + $0x38] sm:$0xff]
    %vm50 = vcmask 261120
    %v52 = vsel %vm50, %v40, 0
    %v55 = vsel %vm50, %v41, 0
    %57 = vmatprep.subr.mxu0 %v43
    %58 = vmatpush1.msra.mxu0 %v42
    %59 = vmatprep.subr.mxu0 %v45
    %60 = vmatpush1.msra.mxu0 %v44
    %61 = vmatprep.subr.mxu0 %v47
    %62 = vmatpush1.msra.mxu0 %v46
    %63 = vmatprep.subr.mxu0 %v49
    %64 = vmatpush1.msra.mxu0 %v48
    %65 = vmatprep.subr.mxu0 0.0
    %66 = vmatpush1.msra.mxu0 0.0
    %67 = vmatprep.subr.mxu0 0.0
    %68 = vmatpush1.msra.mxu0 0.0
    %69 = vmatprep.subr.mxu0 0.0
    %70 = vmatpush1.msra.mxu0 0.0
    %71 = vmatprep.subr.mxu0 0.0
    %72 = vmatpush1.msra.mxu0 0.0
    %73 = vmatprep.subr.mxu0 0.0
    %74 = vmatpush1.msra.mxu0 0.0
    %75 = vmatprep.subr.mxu0 0.0
    %76 = vmatpush1.msra.mxu0 0.0
    %77 = vmatprep.subr.mxu0 0.0
    %78 = vmatpush1.msra.mxu0 0.0
    %79 = vmatprep.subr.mxu0 0.0
    %80 = vmatpush1.msra.mxu0 0.0
    %81 = vmatprep.subr.mxu0 0.0
    %82 = vmatpush1.msra.mxu0 0.0
    %83 = vmatprep.subr.mxu0 0.0
    %84 = vmatpush1.msra.mxu0 0.0
    %85 = vmatprep.subr.mxu0 0.0
    %86 = vmatpush1.msra.mxu0 0.0
    %87 = vmatprep.subr.mxu0 0.0
    %88 = vmatpush1.msra.mxu0 0.0
    %89 = vmatprep.subr.mxu0 0.0
    %90 = vmatpush1.msra.mxu0 0.0
    %91 = vmatprep.subr.mxu0 0.0
    %92 = vmatpush1.msra.mxu0 0.0
    %93 = vmatprep.subr.mxu0 0.0
    %94 = vmatpush1.msra.mxu0 0.0
    %95 = vmatprep.subr.mxu0 0.0
    %96 = vmatpush1.msra.mxu0 0.0
    %97 = vmatprep.subr.mxu0 0.0
    %98 = vmatpush1.msra.mxu0 0.0
    %99 = vmatprep.subr.mxu0 0.0
    %100 = vmatpush1.msra.mxu0 0.0
    %101 = vmatprep.subr.mxu0 0.0
    %102 = vmatpush1.msra.mxu0 0.0
    %103 = vmatprep.subr.mxu0 0.0
    %104 = vmatpush1.msra.mxu0 0.0
    %105 = vmatprep.subr.mxu0 0.0
    %106 = vmatpush1.msra.mxu0 0.0
    %107 = vmatprep.subr.mxu0 0.0
    %108 = vmatpush1.msra.mxu0 0.0
    %109 = vmatprep.subr.mxu0 0.0
    %110 = vmatpush1.msra.mxu0 0.0
    %111 = vmatprep.subr.mxu0 0.0
    %112 = vmatpush1.msra.mxu0 0.0
    %113 = vmatprep.subr.mxu0 0.0
    %114 = vmatpush1.msra.mxu0 0.0
    %115 = vmatprep.subr.mxu0 0.0
    %116 = vmatpush1.msra.mxu0 0.0
    %117 = vmatprep.subr.mxu0 0.0
    %118 = vmatpush1.msra.mxu0 0.0
    %119 = vmatprep.subr.mxu0 0.0
    %120 = vmatpush1.msra.mxu0 0.0
    %121 = vmatprep.mubr.f32.mxu0 0.0
    %122 = vmatmul.mubr.f32.gmra.mrb[0].mxu0 %v52
    %v123 = vpop.f32.mrb[0].mxu0
    %v124 = vadd.f32 0.0, %v123
    %v125 = vpop.f32.mrb[0].mxu0
    %v126 = vadd.f32 0.0, %v125
    %127 = vmatprep.mubr.f32.mxu0 0.0
    %128 = vmatmul.mubr.f32.gmra.mrb[0].mxu0 %v55
    %v129 = vpop.f32.mrb[0].mxu0
    %v130 = vadd.f32 0.0, %v129
    %v131 = vpop.f32.mrb[0].mxu0
    %v132 = vadd.f32 0.0, %v131
    %133 = vdwg.mxu0
    %134 = vst [vmem:[#allocation7] sm:$0xff] %v124
    %135 = vst [vmem:[#allocation7 + $0x8] sm:$0xff] %v126
    %136 = vst [vmem:[#allocation7 + $0x10] sm:$0xff] %v130
    %137 = vst [vmem:[#allocation7 + $0x18] sm:$0xff] %v132
    // Predicated region
    $region18: #{tpu_custom_call.1} parent=1 // pred_check
      _
    $region19: #{tpu_custom_call.1} parent=1 // pred_check_branch
      %139 = sbr.rel (0) target = $region21
    $region20: #{tpu_custom_call.1} parent=1 // pred_region
      %s141 = ssub.s32 512, 512
      %142 = vsyncadd [#allocation4], %s141
      %s143 = sshll.u32 [#allocation7], 4
      %s144 = int_to_ptr.vmem [resolvable:$true] %s143
      %149 = dma.vmem_to_hbm [thread:$0]  %s144, 512, %s2, [#allocation4], 256, 256, 16
    $region21: #{tpu_custom_call.1} parent=1 // pred_fallthru
      _
    // Predicated region
    $region22: #{tpu_custom_call.1} parent=1 // pred_check
      _
    $region23: #{tpu_custom_call.1} parent=1 // pred_check_branch
      %151 = sbr.rel (0) target = $region25
    $region24: #{tpu_custom_call.1} parent=1 // pred_region
      %152 = dma.done [#allocation4], 512
    $region25: #{tpu_custom_call.1} parent=1 // pred_fallthru
      _
    %153 = vsyncpa [#allocation3], 1
    %154 = vsyncpa [#allocation6], 1
    %155 = vsyncpa [#allocation4], 1

</llo_original>
